<compile_context>
chip_gen: v5e
topology: v5e:2x2
jax: 0.10.0
libtpu: 0.0.40
codegen_flags: <defaults>
</compile_context>

<pallas_src>
import math
from functools import partial

import jax
import jax.numpy as jnp
from jax import lax
from jax.experimental import pallas as pl
from jax.experimental.pallas import tpu as pltpu


def _pooler_kernel(x_ref, q_ref, wk_ref, bk_ref, wv_ref, bv_ref,
                   wo_ref, bo_ref, lnw_ref, lnb_ref, mask_t_ref, mask_ref,
                   out_ref, *, eps):
    f32 = jnp.float32
    bt, t, in_dim = x_ref.shape            # batch tile, tokens, key/value feature dim
    h_dim = wk_ref.shape[1]                # attention embed dim

    # ---- K / V projections: one MXU matmul over all (bt * t) token rows -------
    # Keep activations in their native dtype (bf16 stays bf16); accumulate in f32.
    x2 = x_ref[...].reshape(bt * t, in_dim)
    k = jnp.dot(x2, wk_ref[...], preferred_element_type=f32) + bk_ref[...]   # (bt*t, h)
    v = jnp.dot(x2, wv_ref[...], preferred_element_type=f32) + bv_ref[...]   # (bt*t, h)

    # ---- per-head scores (query length == 1; query pre-scaled by 1/sqrt(hd)) --
    # mask_t[j, h] = 1 iff feature j belongs to head h, so this matmul is the
    # per-head dot product of the (pre-scaled) query with each key row.
    qk = q_ref[...] * k                                                       # (bt*t, h)
    s = jnp.dot(qk, mask_t_ref[...], preferred_element_type=f32)              # (bt*t, heads)
    s3 = s.reshape(bt, t, -1)                                                 # (bt, t, heads)

    # ---- softmax over the token axis (f32, max-stabilized) --------------------
    s3 = s3 - jnp.max(s3, axis=1, keepdims=True)
    p = jnp.exp(s3)
    denom = jnp.sum(p, axis=1, keepdims=True)
    p = p * pl.reciprocal(denom, approx=True)                                 # (bt, t, heads)

    # ---- context: broadcast per-head probs over head features, reduce tokens --
    pfull = jnp.dot(p.reshape(bt * t, -1), mask_ref[...],
                    preferred_element_type=f32)                               # (bt*t, h)
    ctx = jnp.sum((pfull * v).reshape(bt, t, h_dim), axis=1)                  # (bt, h)

    # ---- output projection + LayerNorm (eps inside rsqrt, biased variance) ----
    y = jnp.dot(ctx, wo_ref[...], preferred_element_type=f32) + bo_ref[...]   # (bt, h)
    mu = jnp.mean(y, axis=-1, keepdims=True)
    var = jnp.mean((y - mu) ** 2, axis=-1, keepdims=True)
    yn = (y - mu) * lax.rsqrt(var + eps)
    out_ref[...] = (yn * lnw_ref[...] + lnb_ref[...]).astype(out_ref.dtype)


def efficient_eos_attention_pooler(hidden_states, attention_mask, params,
                                   num_tokens, num_heads=8, batch_tile=None):
    """JAX/Pallas equivalent of EfficientEosAttentionPooler.forward.

    attention_mask is accepted for API parity but is unused — the PyTorch
    forward never reads it either.
    """
    del attention_mask
    B, S, in_dim = hidden_states.shape
    h_dim = params["cls_q"].shape[-1]
    assert h_dim % num_heads == 0, (h_dim, num_heads)
    assert params["wq"].shape == (h_dim, h_dim), params["wq"].shape
    assert params["wk"].shape == (h_dim, in_dim), params["wk"].shape
    assert params["wv"].shape == (h_dim, in_dim), params["wv"].shape
    head_dim = h_dim // num_heads
    T = num_tokens
    f32 = jnp.float32

    # Tail-token window (contiguous slice; only B*T*in_dim of extra HBM traffic).
    x = hidden_states[:, S - T:, :]                                 # (B, T, in_dim)

    # Batch-invariant, pre-scaled class-query projection (hoisted out of the kernel).
    q_scaled = ((params["cls_q"].astype(f32) @ params["wq"].astype(f32).T
                 + params["bq"].astype(f32).reshape(1, h_dim))
                * (1.0 / math.sqrt(head_dim)))                      # (1, h_dim)

    # Weights pre-transposed to (K, N); K/V matmul operands in the activation dtype.
    mm_dtype = hidden_states.dtype
    wk_t = params["wk"].T.astype(mm_dtype)                          # (in_dim, h_dim)
    wv_t = params["wv"].T.astype(mm_dtype)                          # (in_dim, h_dim)
    wo_t = params["wo"].T.astype(f32)                               # (h_dim, h_dim)
    bk = params["bk"].astype(f32).reshape(1, h_dim)
    bv = params["bv"].astype(f32).reshape(1, h_dim)
    bo = params["bo"].astype(f32).reshape(1, h_dim)
    lnw = params["ln_w"].astype(f32).reshape(1, h_dim)
    lnb = params["ln_b"].astype(f32).reshape(1, h_dim)

    # head_mask[h, j] = 1 iff feature j belongs to head h.
    head_mask = (jnp.arange(h_dim)[None, :] // head_dim
                 == jnp.arange(num_heads)[:, None]).astype(f32)     # (heads, h_dim)
    head_mask_t = head_mask.T                                       # (h_dim, heads)

    # Batch tile: many elements per grid step; multiple of 8 sublanes when tiling.
    if batch_tile is None:
        batch_tile = 256
    bt = min(batch_tile, B)
    if bt < B:
        bt = max(8, (bt // 8) * 8)
    nb = pl.cdiv(B, bt)

    def shared(shape):
        return pl.BlockSpec(shape, lambda b: (0, 0))

    out = pl.pallas_call(
        partial(_pooler_kernel, eps=1e-5),
        out_shape=jax.ShapeDtypeStruct((B, h_dim), jnp.float32),
        grid=(nb,),
        in_specs=[
            pl.BlockSpec((bt, T, in_dim), lambda b: (b, 0, 0)),  # x (per batch tile)
            shared((1, h_dim)),            # pre-scaled class query
            shared((in_dim, h_dim)),       # wk^T
            shared((1, h_dim)),            # bk
            shared((in_dim, h_dim)),       # wv^T
            shared((1, h_dim)),            # bv
            shared((h_dim, h_dim)),        # wo^T (out_proj.weight^T)
            shared((1, h_dim)),            # bo   (out_proj.bias)
            shared((1, h_dim)),            # LayerNorm weight
            shared((1, h_dim)),            # LayerNorm bias
            shared((h_dim, num_heads)),    # head mask (transposed)
            shared((num_heads, h_dim)),    # head mask
        ],
        out_specs=pl.BlockSpec((bt, h_dim), lambda b: (b, 0)),
        compiler_params=pltpu.CompilerParams(dimension_semantics=("parallel",)),
    )(x, q_scaled, wk_t, bk, wv_t, bv, wo_t, bo, lnw, lnb, head_mask_t, head_mask)
    return out                                                      # (B, h_dim)


def reference(hidden_states, params, num_tokens, num_heads=8):
    """Pure-JAX reference mirroring nn.MultiheadAttention + LayerNorm."""
    x = hidden_states[:, -num_tokens:, :].astype(jnp.float32)       # (B, T, in_dim)
    B, T, _ = x.shape
    h_dim = params["cls_q"].shape[-1]
    hd = h_dim // num_heads
    q = params["cls_q"] @ params["wq"].T + params["bq"]             # (1, h_dim)
    k = jnp.einsum("bti,hi->bth", x, params["wk"]) + params["bk"]
    v = jnp.einsum("bti,hi->bth", x, params["wv"]) + params["bv"]
    qh = q.reshape(num_heads, hd)
    kh = k.reshape(B, T, num_heads, hd)
    vh = v.reshape(B, T, num_heads, hd)
    scores = jnp.einsum("hd,bthd->bht", qh, kh) / math.sqrt(hd)
    p = jax.nn.softmax(scores, axis=-1)
    ctx = jnp.einsum("bht,bthd->bhd", p, vh).reshape(B, h_dim)
    y = ctx @ params["wo"].T + params["bo"]
    mu = jnp.mean(y, axis=-1, keepdims=True)
    var = jnp.mean((y - mu) ** 2, axis=-1, keepdims=True)
    return (y - mu) / jnp.sqrt(var + 1e-5) * params["ln_w"] + params["ln_b"]


if __name__ == "__main__":
    # Small shapes; B=16 with batch_tile=8 exercises the multi-step batch-tiled grid.
    B, S, in_dim, h_dim, num_tokens, num_heads = 16, 12, 48, 32, 8, 8

    key = jax.random.PRNGKey(0)
    ks = jax.random.split(key, 6)
    hidden_states = jax.random.normal(ks[0], (B, S, in_dim), jnp.float32)
    attention_mask = jnp.ones((B, S), jnp.int32)  # unused, matches PyTorch forward

    # Deterministic synthetic parameters (shapes follow the module __init__):
    #   MultiheadAttention(h_dim, 8, kdim=in_dim, vdim=in_dim) projection weights,
    #   biases init to zero, LayerNorm weight=1 / bias=0, cls_q ~ N(0, 0.02).
    params = {
        "cls_q": 0.02 * jax.random.normal(ks[1], (1, h_dim), jnp.float32),
        "wq": 0.02 * jax.random.normal(ks[2], (h_dim, h_dim), jnp.float32),
        "wk": 0.02 * jax.random.normal(ks[3], (h_dim, in_dim), jnp.float32),
        "wv": 0.02 * jax.random.normal(ks[4], (h_dim, in_dim), jnp.float32),
        "bq": jnp.zeros((1, h_dim), jnp.float32),
        "bk": jnp.zeros((1, h_dim), jnp.float32),
        "bv": jnp.zeros((1, h_dim), jnp.float32),
        "wo": 0.02 * jax.random.normal(ks[5], (h_dim, h_dim), jnp.float32),
        "bo": jnp.zeros((1, h_dim), jnp.float32),
        "ln_w": jnp.ones((1, h_dim), jnp.float32),
        "ln_b": jnp.zeros((1, h_dim), jnp.float32),
    }

    out = efficient_eos_attention_pooler(hidden_states, attention_mask, params,
                                         num_tokens, num_heads, batch_tile=8)
    out = jax.block_until_ready(out)

    ref = reference(hidden_states, params, num_tokens, num_heads)
    assert out.shape == (B, h_dim), out.shape
    # Tolerance accounts for the approx-reciprocal softmax normalization (~2^-12 rel).
    assert jnp.allclose(out, ref, atol=1e-3, rtol=1e-3), (out, ref)
    print("KERNEL_OK")
</pallas_src>

<mosaic_0001>
module attributes {stable_mosaic.version = 11 : i64} {
  func.func @_pooler_kernel(%arg0: i32, %arg1: memref<8x8x48xf32, #tpu.memory_space<vmem>>, %arg2: memref<1x32xf32, #tpu.memory_space<vmem>>, %arg3: memref<48x32xf32, #tpu.memory_space<vmem>>, %arg4: memref<1x32xf32, #tpu.memory_space<vmem>>, %arg5: memref<48x32xf32, #tpu.memory_space<vmem>>, %arg6: memref<1x32xf32, #tpu.memory_space<vmem>>, %arg7: memref<32x32xf32, #tpu.memory_space<vmem>>, %arg8: memref<1x32xf32, #tpu.memory_space<vmem>>, %arg9: memref<1x32xf32, #tpu.memory_space<vmem>>, %arg10: memref<1x32xf32, #tpu.memory_space<vmem>>, %arg11: memref<32x8xf32, #tpu.memory_space<vmem>>, %arg12: memref<8x32xf32, #tpu.memory_space<vmem>>, %arg13: memref<8x32xf32, #tpu.memory_space<vmem>>) attributes {dimension_semantics = [#tpu.dimension_semantics<parallel>], iteration_bounds = array<i64: 2>, scalar_prefetch = 0 : i64, scratch_operands = 0 : i64, tpu.core_type = #tpu.core_type<tc>, window_params = [{transform_indices = @transform_0, window_bounds = array<i64: 8, 8, 48>}, {pipeline_mode = #tpu.pipeline_mode<synchronous>, transform_indices = @transform_1, window_bounds = array<i64: 1, 32>}, {pipeline_mode = #tpu.pipeline_mode<synchronous>, transform_indices = @transform_2, window_bounds = array<i64: 48, 32>}, {pipeline_mode = #tpu.pipeline_mode<synchronous>, transform_indices = @transform_3, window_bounds = array<i64: 1, 32>}, {pipeline_mode = #tpu.pipeline_mode<synchronous>, transform_indices = @transform_4, window_bounds = array<i64: 48, 32>}, {pipeline_mode = #tpu.pipeline_mode<synchronous>, transform_indices = @transform_5, window_bounds = array<i64: 1, 32>}, {pipeline_mode = #tpu.pipeline_mode<synchronous>, transform_indices = @transform_6, window_bounds = array<i64: 32, 32>}, {pipeline_mode = #tpu.pipeline_mode<synchronous>, transform_indices = @transform_7, window_bounds = array<i64: 1, 32>}, {pipeline_mode = #tpu.pipeline_mode<synchronous>, transform_indices = @transform_8, window_bounds = array<i64: 1, 32>}, {pipeline_mode = #tpu.pipeline_mode<synchronous>, transform_indices = @transform_9, window_bounds = array<i64: 1, 32>}, {pipeline_mode = #tpu.pipeline_mode<synchronous>, transform_indices = @transform_10, window_bounds = array<i64: 32, 8>}, {pipeline_mode = #tpu.pipeline_mode<synchronous>, transform_indices = @transform_11, window_bounds = array<i64: 8, 32>}, {transform_indices = @transform_12, window_bounds = array<i64: 8, 32>}]} {
    %c0 = arith.constant 0 : index
    %c0_0 = arith.constant 0 : index
    %c0_1 = arith.constant 0 : index
    %0 = vector.load %arg1[%c0, %c0_0, %c0_1] : memref<8x8x48xf32, #tpu.memory_space<vmem>>, vector<8x8x48xf32>
    %1 = vector.shape_cast %0 : vector<8x8x48xf32> to vector<64x48xf32>
    %c0_2 = arith.constant 0 : index
    %c0_3 = arith.constant 0 : index
    %2 = vector.load %arg3[%c0_2, %c0_3] : memref<48x32xf32, #tpu.memory_space<vmem>>, vector<48x32xf32>
    %cst = arith.constant dense<0.000000e+00> : vector<64x32xf32>
    %3 = tpu.matmul %1, %2, %cst {dimension_numbers = #tpu.dot_dimension_numbers<[1], [0], [0], [1], [0, 0, 1, 1], [], []>} : vector<64x48xf32>, vector<48x32xf32>, vector<64x32xf32> -> vector<64x32xf32>
    %c0_4 = arith.constant 0 : index
    %c0_5 = arith.constant 0 : index
    %4 = vector.load %arg4[%c0_4, %c0_5] : memref<1x32xf32, #tpu.memory_space<vmem>>, vector<1x32xf32>
    %5 = vector.broadcast %4 : vector<1x32xf32> to vector<64x32xf32>
    %6 = arith.addf %3, %5 : vector<64x32xf32>
    %c0_6 = arith.constant 0 : index
    %c0_7 = arith.constant 0 : index
    %7 = vector.load %arg5[%c0_6, %c0_7] : memref<48x32xf32, #tpu.memory_space<vmem>>, vector<48x32xf32>
    %cst_8 = arith.constant dense<0.000000e+00> : vector<64x32xf32>
    %8 = tpu.matmul %1, %7, %cst_8 {dimension_numbers = #tpu.dot_dimension_numbers<[1], [0], [0], [1], [0, 0, 1, 1], [], []>} : vector<64x48xf32>, vector<48x32xf32>, vector<64x32xf32> -> vector<64x32xf32>
    %c0_9 = arith.constant 0 : index
    %c0_10 = arith.constant 0 : index
    %9 = vector.load %arg6[%c0_9, %c0_10] : memref<1x32xf32, #tpu.memory_space<vmem>>, vector<1x32xf32>
    %10 = vector.broadcast %9 : vector<1x32xf32> to vector<64x32xf32>
    %11 = arith.addf %8, %10 : vector<64x32xf32>
    %c0_11 = arith.constant 0 : index
    %c0_12 = arith.constant 0 : index
    %12 = vector.load %arg2[%c0_11, %c0_12] : memref<1x32xf32, #tpu.memory_space<vmem>>, vector<1x32xf32>
    %13 = vector.broadcast %12 : vector<1x32xf32> to vector<64x32xf32>
    %14 = arith.mulf %13, %6 : vector<64x32xf32>
    %c0_13 = arith.constant 0 : index
    %c0_14 = arith.constant 0 : index
    %15 = vector.load %arg11[%c0_13, %c0_14] : memref<32x8xf32, #tpu.memory_space<vmem>>, vector<32x8xf32>
    %cst_15 = arith.constant dense<0.000000e+00> : vector<64x8xf32>
    %16 = tpu.matmul %14, %15, %cst_15 {dimension_numbers = #tpu.dot_dimension_numbers<[1], [0], [0], [1], [0, 0, 1, 1], [], []>} : vector<64x32xf32>, vector<32x8xf32>, vector<64x8xf32> -> vector<64x8xf32>
    %17 = vector.shape_cast %16 : vector<64x8xf32> to vector<8x8x8xf32>
    %cst_16 = arith.constant dense<0xFF800000> : vector<8x8xf32>
    %18 = vector.multi_reduction <maximumf>, %17, %cst_16 [1] : vector<8x8x8xf32> to vector<8x8xf32>
    %19 = vector.shape_cast %18 : vector<8x8xf32> to vector<8x1x8xf32>
    %20 = vector.broadcast %19 : vector<8x1x8xf32> to vector<8x8x8xf32>
    %21 = arith.subf %17, %20 : vector<8x8x8xf32>
    %22 = math.exp %21 : vector<8x8x8xf32>
    %cst_17 = arith.constant dense<0.000000e+00> : vector<8x8xf32>
    %23 = vector.multi_reduction <add>, %22, %cst_17 [1] : vector<8x8x8xf32> to vector<8x8xf32>
    %24 = vector.shape_cast %23 : vector<8x8xf32> to vector<8x1x8xf32>
    %25 = tpu.reciprocal %24 {approx = true} : vector<8x1x8xf32> -> vector<8x1x8xf32>
    %26 = vector.broadcast %25 : vector<8x1x8xf32> to vector<8x8x8xf32>
    %27 = arith.mulf %22, %26 : vector<8x8x8xf32>
    %28 = vector.shape_cast %27 : vector<8x8x8xf32> to vector<64x8xf32>
    %c0_18 = arith.constant 0 : index
    %c0_19 = arith.constant 0 : index
    %29 = vector.load %arg12[%c0_18, %c0_19] : memref<8x32xf32, #tpu.memory_space<vmem>>, vector<8x32xf32>
    %cst_20 = arith.constant dense<0.000000e+00> : vector<64x32xf32>
    %30 = tpu.matmul %28, %29, %cst_20 {dimension_numbers = #tpu.dot_dimension_numbers<[1], [0], [0], [1], [0, 0, 1, 1], [], []>} : vector<64x8xf32>, vector<8x32xf32>, vector<64x32xf32> -> vector<64x32xf32>
    %31 = arith.mulf %30, %11 : vector<64x32xf32>
    %32 = vector.shape_cast %31 : vector<64x32xf32> to vector<8x8x32xf32>
    %cst_21 = arith.constant dense<0.000000e+00> : vector<8x32xf32>
    %33 = vector.multi_reduction <add>, %32, %cst_21 [1] : vector<8x8x32xf32> to vector<8x32xf32>
    %c0_22 = arith.constant 0 : index
    %c0_23 = arith.constant 0 : index
    %34 = vector.load %arg7[%c0_22, %c0_23] : memref<32x32xf32, #tpu.memory_space<vmem>>, vector<32x32xf32>
    %cst_24 = arith.constant dense<0.000000e+00> : vector<8x32xf32>
    %35 = tpu.matmul %33, %34, %cst_24 {dimension_numbers = #tpu.dot_dimension_numbers<[1], [0], [0], [1], [0, 0, 1, 1], [], []>} : vector<8x32xf32>, vector<32x32xf32>, vector<8x32xf32> -> vector<8x32xf32>
    %c0_25 = arith.constant 0 : index
    %c0_26 = arith.constant 0 : index
    %36 = vector.load %arg8[%c0_25, %c0_26] : memref<1x32xf32, #tpu.memory_space<vmem>>, vector<1x32xf32>
    %37 = vector.broadcast %36 : vector<1x32xf32> to vector<8x32xf32>
    %38 = arith.addf %35, %37 : vector<8x32xf32>
    %cst_27 = arith.constant dense<0.000000e+00> : vector<8xf32>
    %39 = vector.multi_reduction <add>, %38, %cst_27 [1] : vector<8x32xf32> to vector<8xf32>
    %40 = vector.shape_cast %39 : vector<8xf32> to vector<8x1xf32>
    %cst_28 = arith.constant 3.200000e+01 : f32
    %41 = vector.broadcast %cst_28 : f32 to vector<8x1xf32>
    %42 = arith.divf %40, %41 : vector<8x1xf32>
    %43 = vector.broadcast %42 : vector<8x1xf32> to vector<8x32xf32>
    %44 = arith.subf %38, %43 : vector<8x32xf32>
    %45 = arith.mulf %44, %44 : vector<8x32xf32>
    %cst_29 = arith.constant dense<0.000000e+00> : vector<8xf32>
    %46 = vector.multi_reduction <add>, %45, %cst_29 [1] : vector<8x32xf32> to vector<8xf32>
    %47 = vector.shape_cast %46 : vector<8xf32> to vector<8x1xf32>
    %cst_30 = arith.constant 3.200000e+01 : f32
    %48 = vector.broadcast %cst_30 : f32 to vector<8x1xf32>
    %49 = arith.divf %47, %48 : vector<8x1xf32>
    %50 = vector.broadcast %42 : vector<8x1xf32> to vector<8x32xf32>
    %51 = arith.subf %38, %50 : vector<8x32xf32>
    %cst_31 = arith.constant 9.99999974E-6 : f32
    %52 = vector.broadcast %cst_31 : f32 to vector<8x1xf32>
    %53 = arith.addf %49, %52 : vector<8x1xf32>
    %54 = math.rsqrt %53 : vector<8x1xf32>
    %55 = vector.broadcast %54 : vector<8x1xf32> to vector<8x32xf32>
    %56 = arith.mulf %51, %55 : vector<8x32xf32>
    %c0_32 = arith.constant 0 : index
    %c0_33 = arith.constant 0 : index
    %57 = vector.load %arg9[%c0_32, %c0_33] : memref<1x32xf32, #tpu.memory_space<vmem>>, vector<1x32xf32>
    %58 = vector.broadcast %57 : vector<1x32xf32> to vector<8x32xf32>
    %59 = arith.mulf %56, %58 : vector<8x32xf32>
    %c0_34 = arith.constant 0 : index
    %c0_35 = arith.constant 0 : index
    %60 = vector.load %arg10[%c0_34, %c0_35] : memref<1x32xf32, #tpu.memory_space<vmem>>, vector<1x32xf32>
    %61 = vector.broadcast %60 : vector<1x32xf32> to vector<8x32xf32>
    %62 = arith.addf %59, %61 : vector<8x32xf32>
    %c0_36 = arith.constant 0 : index
    %c0_37 = arith.constant 0 : index
    %63 = vector.load %arg13[%c0_36, %c0_37] : memref<8x32xf32, #tpu.memory_space<vmem>>, vector<8x32xf32>
    tpu.vector_store %arg13[%c0_36, %c0_37], %62 {strides = array<i32>} : memref<8x32xf32, #tpu.memory_space<vmem>>, vector<8x32xf32>,
    return
  }
  func.func @transform_0(%arg0: i32) -> (i32, i32, i32) {
    %c0_i32 = arith.constant 0 : i32
    %c0_i32_0 = arith.constant 0 : i32
    %c0_i32_1 = arith.constant 0 : i32
    return %arg0, %c0_i32, %c0_i32_0 : i32, i32, i32
  }
  func.func @transform_1(%arg0: i32) -> (i32, i32) {
    %c0_i32 = arith.constant 0 : i32
    %c0_i32_0 = arith.constant 0 : i32
    %c0_i32_1 = arith.constant 0 : i32
    return %c0_i32, %c0_i32_0 : i32, i32
  }
  func.func @transform_2(%arg0: i32) -> (i32, i32) {
    %c0_i32 = arith.constant 0 : i32
    %c0_i32_0 = arith.constant 0 : i32
    %c0_i32_1 = arith.constant 0 : i32
    return %c0_i32, %c0_i32_0 : i32, i32
  }
  func.func @transform_3(%arg0: i32) -> (i32, i32) {
    %c0_i32 = arith.constant 0 : i32
    %c0_i32_0 = arith.constant 0 : i32
    %c0_i32_1 = arith.constant 0 : i32
    return %c0_i32, %c0_i32_0 : i32, i32
  }
  func.func @transform_4(%arg0: i32) -> (i32, i32) {
    %c0_i32 = arith.constant 0 : i32
    %c0_i32_0 = arith.constant 0 : i32
    %c0_i32_1 = arith.constant 0 : i32
    return %c0_i32, %c0_i32_0 : i32, i32
  }
  func.func @transform_5(%arg0: i32) -> (i32, i32) {
    %c0_i32 = arith.constant 0 : i32
    %c0_i32_0 = arith.constant 0 : i32
    %c0_i32_1 = arith.constant 0 : i32
    return %c0_i32, %c0_i32_0 : i32, i32
  }
  func.func @transform_6(%arg0: i32) -> (i32, i32) {
    %c0_i32 = arith.constant 0 : i32
    %c0_i32_0 = arith.constant 0 : i32
    %c0_i32_1 = arith.constant 0 : i32
    return %c0_i32, %c0_i32_0 : i32, i32
  }
  func.func @transform_7(%arg0: i32) -> (i32, i32) {
    %c0_i32 = arith.constant 0 : i32
    %c0_i32_0 = arith.constant 0 : i32
    %c0_i32_1 = arith.constant 0 : i32
    return %c0_i32, %c0_i32_0 : i32, i32
  }
  func.func @transform_8(%arg0: i32) -> (i32, i32) {
    %c0_i32 = arith.constant 0 : i32
    %c0_i32_0 = arith.constant 0 : i32
    %c0_i32_1 = arith.constant 0 : i32
    return %c0_i32, %c0_i32_0 : i32, i32
  }
  func.func @transform_9(%arg0: i32) -> (i32, i32) {
    %c0_i32 = arith.constant 0 : i32
    %c0_i32_0 = arith.constant 0 : i32
    %c0_i32_1 = arith.constant 0 : i32
    return %c0_i32, %c0_i32_0 : i32, i32
  }
  func.func @transform_10(%arg0: i32) -> (i32, i32) {
    %c0_i32 = arith.constant 0 : i32
    %c0_i32_0 = arith.constant 0 : i32
    %c0_i32_1 = arith.constant 0 : i32
    return %c0_i32, %c0_i32_0 : i32, i32
  }
  func.func @transform_11(%arg0: i32) -> (i32, i32) {
    %c0_i32 = arith.constant 0 : i32
    %c0_i32_0 = arith.constant 0 : i32
    %c0_i32_1 = arith.constant 0 : i32
    return %c0_i32, %c0_i32_0 : i32, i32
  }
  func.func @transform_12(%arg0: i32) -> (i32, i32) {
    %c0_i32 = arith.constant 0 : i32
    %c0_i32_0 = arith.constant 0 : i32
    return %arg0, %c0_i32 : i32, i32
  }
}

</mosaic_0001>

<llo_original>
// kernel: tpu_custom_call.1
$region0: #{tpu_custom_call.1}
  #allocation0 [shape = 'u32[]', space=smem, size = 0x4, offset = 0x4, fixed_abs, tag = 'smem constant byte address 0x4 - core index']
  #allocation1 [shape = 'u32[72,128]{1,0:T(1,128)}', space=vmem, size = 0x9000, scoped, tag = 'internal scratch']
  %s0 = inlined_call_operand.vmem [shape: f32[16,8,48], index: 0, kind: input, shape index: {}]
  %s1 = inlined_call_operand.vmem [shape: f32[1,32], index: 1, kind: input, shape index: {}]
  %s2 = inlined_call_operand.vmem [shape: f32[48,32], index: 2, kind: input, shape index: {}]
  %s3 = inlined_call_operand.hbm [shape: f32[1,32], index: 3, kind: input, shape index: {}]
  %s4 = inlined_call_operand.vmem [shape: f32[48,32], index: 4, kind: input, shape index: {}]
  %s5 = inlined_call_operand.hbm [shape: f32[1,32], index: 5, kind: input, shape index: {}]
  %s6 = inlined_call_operand.hbm [shape: f32[32,32], index: 6, kind: input, shape index: {}]
  %s7 = inlined_call_operand.hbm [shape: f32[1,32], index: 7, kind: input, shape index: {}]
  %s8 = inlined_call_operand.hbm [shape: f32[1,32], index: 8, kind: input, shape index: {}]
  %s9 = inlined_call_operand.hbm [shape: f32[1,32], index: 9, kind: input, shape index: {}]
  %s10 = inlined_call_operand.vmem [shape: f32[32,8], index: 10, kind: input, shape index: {}]
  %s11 = inlined_call_operand.vmem [shape: f32[8,32], index: 11, kind: input, shape index: {}]
  %s12 = inlined_call_operand.hbm [shape: f32[16,32], index: 12, kind: output, shape index: {}]
  %s13 = sld [smem:[#allocation0]]
  $region105: #{tpu_custom_call.1} parent=0
    _
  %s15 = ssub.s32 1, %s13
  %s16 = scalar_select 0, %s15, %s13
  $region1: #{tpu_custom_call.1} parent=0
    #allocation2 [shape = 'u8[512]{0}', space=vmem, size = 0x400, scoped, tag = 'input window, operand 3, single buffered']
    #allocation3 [shape = 's32[2]{0}', space=sflag, size = 0x8, scoped, tag = 'scoped memory for tpu_custom_call.1']
    #allocation4 [shape = 's32[2]{0}', space=sflag, size = 0x8, scoped, tag = 'scoped memory for tpu_custom_call.1']
    #allocation5 [shape = 'u8[512]{0}', space=vmem, size = 0x400, scoped, tag = 'input window, operand 5, single buffered']
    #allocation6 [shape = 's32[1]{0}', space=sflag, size = 0x4, scoped, tag = 'scoped memory for tpu_custom_call.1']
    #allocation7 [shape = 'u8[16384]{0}', space=vmem, size = 0x4000, scoped, tag = 'input window, operand 6, single buffered']
    #allocation8 [shape = 'u8[512]{0}', space=vmem, size = 0x400, scoped, tag = 'input window, operand 7, single buffered']
    #allocation9 [shape = 's32[1]{0}', space=sflag, size = 0x4, scoped, tag = 'scoped memory for tpu_custom_call.1']
    #allocation10 [shape = 'u8[512]{0}', space=vmem, size = 0x400, scoped, tag = 'input window, operand 8, single buffered']
    #allocation11 [shape = 'u8[512]{0}', space=vmem, size = 0x400, scoped, tag = 'input window, operand 9, single buffered']
    #allocation12 [shape = 's32[1]{0}', space=sflag, size = 0x4, scoped, tag = 'scoped memory for tpu_custom_call.1']
    #allocation13 [shape = 'u8[8192]{0}', space=vmem, size = 0x2000, scoped, tag = 'output window, operand 0']
    %17 = vsyncpa [#allocation3], 0
    %18 = vsyncpa [#allocation6], 0
    %19 = vsyncpa [#allocation9], 0
    %20 = vsyncpa [#allocation12], 0
    %21 = vsyncpa [#allocation4], 0
    %s22 = scalar_lea.sflag [#allocation4], 1
    %23 = vsyncpa %s22, 0
    loop: start=0, step=1, limit=4
    $region2: #{tpu_custom_call.1} parent=1 // loop_pre_header
      _
    $region3: #{tpu_custom_call.1} parent=1 // loop_header
      %s25 = sphi 0, %s29
      %p26 = scmp.ge.s32.totalorder %s25, 4
      %s35 = sphi 0, %s37
      %s38 = sphi 0, %s35
      %s39 = sphi 0, %s38
      %s55 = sphi 0, %s39
      %s59 = sphi 0, %s59
      %s61 = sphi 0, %s59
      %s62 = sphi 0, %s61
      %s76 = sphi 0, %s62
      %s80 = sphi 0, %s80
      %s82 = sphi 0, %s80
      %s83 = sphi 0, %s82
      %s97 = sphi 0, %s83
      %s101 = sphi 0, %s101
      %s103 = sphi 0, %s101
      %s104 = sphi 0, %s103
      %s118 = sphi 0, %s104
      %s122 = sphi 0, %s122
      %s124 = sphi 0, %s122
      %s125 = sphi 0, %s124
      %s139 = sphi 0, %s125
      %s143 = sphi 0, %s143
      %s145 = sphi 0, %s143
      %s146 = sphi 0, %s145
      %s160 = sphi 0, %s146
      %s164 = sphi 0, %s164
      %s166 = sphi 0, %s164
      %s167 = sphi 0, %s166
      %s181 = sphi 0, %s167
      %s185 = sphi 0, %s185
      %s187 = sphi 0, %s185
      %s188 = sphi 0, %s187
      %s202 = sphi 0, %s188
      %s206 = sphi 0, %s206
      %s208 = sphi 0, %s206
      %s209 = sphi 0, %s208
      %s223 = sphi 0, %s209
      %s227 = sphi 0, %s227
      %s229 = sphi 0, %s227
      %s230 = sphi 0, %s229
      %s244 = sphi 0, %s230
      %s248 = sphi 0, %s248
      %s250 = sphi 0, %s248
      %s251 = sphi 0, %s250
      %s265 = sphi 0, %s251
      %s269 = sphi 0, %s269
      %s271 = sphi 0, %s269
      %s272 = sphi 0, %s271
      %s286 = sphi 0, %s272
      %s292 = sphi 0, %s294
      %s295 = sphi 0, %s292
      %s296 = sphi 0, %s295
      %s312 = sphi 0, %s296
    $region4: #{tpu_custom_call.1} parent=1 // loop_header_branch
      %28 = sbr.rel (%p26) target = $region8
    $region5: #{tpu_custom_call.1} parent=1 // loop_body
      %s30 = ssub.s32 %s25, 1
      %s31 = ssub.s32 %s25, 2
      %s32 = sadd.s32 %s25, 1
      %s33 = ssub.s32 %s25, %s32
      %p34 = scmp.eq.s32.totalorder %s33, 0
      %s36 = sadd.s32 %s35, 1
      %s37 = scalar_select %p34, %s35, %s36
      %p40 = pneg %p34
      %p41 = scmp.eq.s32.totalorder %s25, 1
      %p42 = por %p40, %p41
      %p43 = scmp.ne.s32.totalorder %s35, %s38
      %p44 = scmp.eq.s32.totalorder %s25, 0
      %p45 = por %p43, %p44
      %p46 = scmp.ne.s32.totalorder %s35, %s38
      %p47 = scmp.eq.s32.totalorder %s30, 1
      %p48 = por %p46, %p47
      %p49 = scmp.ne.s32.totalorder %s38, %s39
      %p50 = scmp.eq.s32.totalorder %s30, 0
      %p51 = por %p49, %p50
      %p52 = scmp.ne.s32.totalorder %s38, %s39
      %p53 = scmp.eq.s32.totalorder %s31, 1
      %p54 = por %p52, %p53
      %p56 = scmp.ne.s32.totalorder %s39, %s55
      %p57 = scmp.eq.s32.totalorder %s31, 0
      %p58 = por %p56, %p57
      %s60 = sadd.s32 %s59, 1
      %p63 = scmp.eq.s32.totalorder %s25, 1
      %p64 = scmp.ne.s32.totalorder %s59, %s61
      %p65 = scmp.eq.s32.totalorder %s25, 0
      %p66 = por %p64, %p65
      %p67 = scmp.ne.s32.totalorder %s59, %s61
      %p68 = scmp.eq.s32.totalorder %s30, 1
      %p69 = por %p67, %p68
      %p70 = scmp.ne.s32.totalorder %s61, %s62
      %p71 = scmp.eq.s32.totalorder %s30, 0
      %p72 = por %p70, %p71
      %p73 = scmp.ne.s32.totalorder %s61, %s62
      %p74 = scmp.eq.s32.totalorder %s31, 1
      %p75 = por %p73, %p74
      %p77 = scmp.ne.s32.totalorder %s62, %s76
      %p78 = scmp.eq.s32.totalorder %s31, 0
      %p79 = por %p77, %p78
      %s81 = sadd.s32 %s80, 1
      %p84 = scmp.eq.s32.totalorder %s25, 1
      %p85 = scmp.ne.s32.totalorder %s80, %s82
      %p86 = scmp.eq.s32.totalorder %s25, 0
      %p87 = por %p85, %p86
      %p88 = scmp.ne.s32.totalorder %s80, %s82
      %p89 = scmp.eq.s32.totalorder %s30, 1
      %p90 = por %p88, %p89
      %p91 = scmp.ne.s32.totalorder %s82, %s83
      %p92 = scmp.eq.s32.totalorder %s30, 0
      %p93 = por %p91, %p92
      %p94 = scmp.ne.s32.totalorder %s82, %s83
      %p95 = scmp.eq.s32.totalorder %s31, 1
      %p96 = por %p94, %p95
      %p98 = scmp.ne.s32.totalorder %s83, %s97
      %p99 = scmp.eq.s32.totalorder %s31, 0
      %p100 = por %p98, %p99
      %s102 = sadd.s32 %s101, 1
      %p105 = scmp.eq.s32.totalorder %s25, 1
      %p106 = scmp.ne.s32.totalorder %s101, %s103
      %p107 = scmp.eq.s32.totalorder %s25, 0
      %p108 = por %p106, %p107
      %p109 = scmp.ne.s32.totalorder %s101, %s103
      %p110 = scmp.eq.s32.totalorder %s30, 1
      %p111 = por %p109, %p110
      %p112 = scmp.ne.s32.totalorder %s103, %s104
      %p113 = scmp.eq.s32.totalorder %s30, 0
      %p114 = por %p112, %p113
      %p115 = scmp.ne.s32.totalorder %s103, %s104
      %p116 = scmp.eq.s32.totalorder %s31, 1
      %p117 = por %p115, %p116
      %p119 = scmp.ne.s32.totalorder %s104, %s118
      %p120 = scmp.eq.s32.totalorder %s31, 0
      %p121 = por %p119, %p120
      %s123 = sadd.s32 %s122, 1
      %p126 = scmp.eq.s32.totalorder %s25, 1
      %p127 = scmp.ne.s32.totalorder %s122, %s124
      %p128 = scmp.eq.s32.totalorder %s25, 0
      %p129 = por %p127, %p128
      %p130 = scmp.ne.s32.totalorder %s122, %s124
      %p131 = scmp.eq.s32.totalorder %s30, 1
      %p132 = por %p130, %p131
      %p133 = scmp.ne.s32.totalorder %s124, %s125
      %p134 = scmp.eq.s32.totalorder %s30, 0
      %p135 = por %p133, %p134
      %p136 = scmp.ne.s32.totalorder %s124, %s125
      %p137 = scmp.eq.s32.totalorder %s31, 1
      %p138 = por %p136, %p137
      %p140 = scmp.ne.s32.totalorder %s125, %s139
      %p141 = scmp.eq.s32.totalorder %s31, 0
      %p142 = por %p140, %p141
      %s144 = sadd.s32 %s143, 1
      %p147 = scmp.eq.s32.totalorder %s25, 1
      %p148 = scmp.ne.s32.totalorder %s143, %s145
      %p149 = scmp.eq.s32.totalorder %s25, 0
      %p150 = por %p148, %p149
      %p151 = scmp.ne.s32.totalorder %s143, %s145
      %p152 = scmp.eq.s32.totalorder %s30, 1
      %p153 = por %p151, %p152
      %p154 = scmp.ne.s32.totalorder %s145, %s146
      %p155 = scmp.eq.s32.totalorder %s30, 0
      %p156 = por %p154, %p155
      %p157 = scmp.ne.s32.totalorder %s145, %s146
      %p158 = scmp.eq.s32.totalorder %s31, 1
      %p159 = por %p157, %p158
      %p161 = scmp.ne.s32.totalorder %s146, %s160
      %p162 = scmp.eq.s32.totalorder %s31, 0
      %p163 = por %p161, %p162
      %s165 = sadd.s32 %s164, 1
      %p168 = scmp.eq.s32.totalorder %s25, 1
      %p169 = scmp.ne.s32.totalorder %s164, %s166
      %p170 = scmp.eq.s32.totalorder %s25, 0
      %p171 = por %p169, %p170
      %p172 = scmp.ne.s32.totalorder %s164, %s166
      %p173 = scmp.eq.s32.totalorder %s30, 1
      %p174 = por %p172, %p173
      %p175 = scmp.ne.s32.totalorder %s166, %s167
      %p176 = scmp.eq.s32.totalorder %s30, 0
      %p177 = por %p175, %p176
      %p178 = scmp.ne.s32.totalorder %s166, %s167
      %p179 = scmp.eq.s32.totalorder %s31, 1
      %p180 = por %p178, %p179
      %p182 = scmp.ne.s32.totalorder %s167, %s181
      %p183 = scmp.eq.s32.totalorder %s31, 0
      %p184 = por %p182, %p183
      %s186 = sadd.s32 %s185, 1
      %p189 = scmp.eq.s32.totalorder %s25, 1
      %p190 = scmp.ne.s32.totalorder %s185, %s187
      %p191 = scmp.eq.s32.totalorder %s25, 0
      %p192 = por %p190, %p191
      %p193 = scmp.ne.s32.totalorder %s185, %s187
      %p194 = scmp.eq.s32.totalorder %s30, 1
      %p195 = por %p193, %p194
      %p196 = scmp.ne.s32.totalorder %s187, %s188
      %p197 = scmp.eq.s32.totalorder %s30, 0
      %p198 = por %p196, %p197
      %p199 = scmp.ne.s32.totalorder %s187, %s188
      %p200 = scmp.eq.s32.totalorder %s31, 1
      %p201 = por %p199, %p200
      %p203 = scmp.ne.s32.totalorder %s188, %s202
      %p204 = scmp.eq.s32.totalorder %s31, 0
      %p205 = por %p203, %p204
      %s207 = sadd.s32 %s206, 1
      %p210 = scmp.eq.s32.totalorder %s25, 1
      %p211 = scmp.ne.s32.totalorder %s206, %s208
      %p212 = scmp.eq.s32.totalorder %s25, 0
      %p213 = por %p211, %p212
      %p214 = scmp.ne.s32.totalorder %s206, %s208
      %p215 = scmp.eq.s32.totalorder %s30, 1
      %p216 = por %p214, %p215
      %p217 = scmp.ne.s32.totalorder %s208, %s209
      %p218 = scmp.eq.s32.totalorder %s30, 0
      %p219 = por %p217, %p218
      %p220 = scmp.ne.s32.totalorder %s208, %s209
      %p221 = scmp.eq.s32.totalorder %s31, 1
      %p222 = por %p220, %p221
      %p224 = scmp.ne.s32.totalorder %s209, %s223
      %p225 = scmp.eq.s32.totalorder %s31, 0
      %p226 = por %p224, %p225
      %s228 = sadd.s32 %s227, 1
      %p231 = scmp.eq.s32.totalorder %s25, 1
      %p232 = scmp.ne.s32.totalorder %s227, %s229
      %p233 = scmp.eq.s32.totalorder %s25, 0
      %p234 = por %p232, %p233
      %p235 = scmp.ne.s32.totalorder %s227, %s229
      %p236 = scmp.eq.s32.totalorder %s30, 1
      %p237 = por %p235, %p236
      %p238 = scmp.ne.s32.totalorder %s229, %s230
      %p239 = scmp.eq.s32.totalorder %s30, 0
      %p240 = por %p238, %p239
      %p241 = scmp.ne.s32.totalorder %s229, %s230
      %p242 = scmp.eq.s32.totalorder %s31, 1
      %p243 = por %p241, %p242
      %p245 = scmp.ne.s32.totalorder %s230, %s244
      %p246 = scmp.eq.s32.totalorder %s31, 0
      %p247 = por %p245, %p246
      %s249 = sadd.s32 %s248, 1
      %p252 = scmp.eq.s32.totalorder %s25, 1
      %p253 = scmp.ne.s32.totalorder %s248, %s250
      %p254 = scmp.eq.s32.totalorder %s25, 0
      %p255 = por %p253, %p254
      %p256 = scmp.ne.s32.totalorder %s248, %s250
      %p257 = scmp.eq.s32.totalorder %s30, 1
      %p258 = por %p256, %p257
      %p259 = scmp.ne.s32.totalorder %s250, %s251
      %p260 = scmp.eq.s32.totalorder %s30, 0
      %p261 = por %p259, %p260
      %p262 = scmp.ne.s32.totalorder %s250, %s251
      %p263 = scmp.eq.s32.totalorder %s31, 1
      %p264 = por %p262, %p263
      %p266 = scmp.ne.s32.totalorder %s251, %s265
      %p267 = scmp.eq.s32.totalorder %s31, 0
      %p268 = por %p266, %p267
      %s270 = sadd.s32 %s269, 1
      %p273 = scmp.eq.s32.totalorder %s25, 1
      %p274 = scmp.ne.s32.totalorder %s269, %s271
      %p275 = scmp.eq.s32.totalorder %s25, 0
      %p276 = por %p274, %p275
      %p277 = scmp.ne.s32.totalorder %s269, %s271
      %p278 = scmp.eq.s32.totalorder %s30, 1
      %p279 = por %p277, %p278
      %p280 = scmp.ne.s32.totalorder %s271, %s272
      %p281 = scmp.eq.s32.totalorder %s30, 0
      %p282 = por %p280, %p281
      %p283 = scmp.ne.s32.totalorder %s271, %s272
      %p284 = scmp.eq.s32.totalorder %s31, 1
      %p285 = por %p283, %p284
      %p287 = scmp.ne.s32.totalorder %s272, %s286
      %p288 = scmp.eq.s32.totalorder %s31, 0
      %p289 = por %p287, %p288
      %s290 = ssub.s32 %s25, %s32
      %p291 = scmp.eq.s32.totalorder %s290, 0
      %s293 = sadd.s32 %s292, 1
      %s294 = scalar_select %p291, %s292, %s293
      %p297 = pneg %p291
      %p298 = scmp.eq.s32.totalorder %s25, 1
      %p299 = por %p297, %p298
      %p300 = scmp.ne.s32.totalorder %s292, %s295
      %p301 = scmp.eq.s32.totalorder %s25, 0
      %p302 = por %p300, %p301
      %p303 = scmp.ne.s32.totalorder %s292, %s295
      %p304 = scmp.eq.s32.totalorder %s30, 1
      %p305 = por %p303, %p304
      %p306 = scmp.ne.s32.totalorder %s295, %s296
      %p307 = scmp.eq.s32.totalorder %s30, 0
      %p308 = por %p306, %p307
      %p309 = scmp.ne.s32.totalorder %s295, %s296
      %p310 = scmp.eq.s32.totalorder %s31, 1
      %p311 = por %p309, %p310
      %p313 = scmp.ne.s32.totalorder %s296, %s312
      %p314 = scmp.eq.s32.totalorder %s31, 0
      %p315 = por %p313, %p314
      %p316 = scmp.le.s32.totalorder 1, %s25
      %p317 = scmp.lt.s32.totalorder %s25, 3
      %p318 = pnand %p316, %p317
      %p319 = pneg %p318
      // Predicated region
      $region9: #{tpu_custom_call.1} parent=5 // pred_check
        _
      $region10: #{tpu_custom_call.1} parent=5 // pred_check_branch
        %321 = sbr.rel (%p318) target = $region12
      $region11: #{tpu_custom_call.1} parent=5 // pred_region
        %s322 = ssub.s32 %s25, 1
        // Predicated region
        $region13: #{tpu_custom_call.1} parent=11 // pred_check
          %p323 = pneg %p72
        $region14: #{tpu_custom_call.1} parent=11 // pred_check_branch
          %325 = sbr.rel (%p323) target = $region16
        $region15: #{tpu_custom_call.1} parent=11 // pred_region
          _
        $region16: #{tpu_custom_call.1} parent=11 // pred_fallthru
          _
        // Predicated region
        $region17: #{tpu_custom_call.1} parent=11 // pred_check
          %p326 = pneg %p93
        $region18: #{tpu_custom_call.1} parent=11 // pred_check_branch
          %328 = sbr.rel (%p326) target = $region20
        $region19: #{tpu_custom_call.1} parent=11 // pred_region
          _
        $region20: #{tpu_custom_call.1} parent=11 // pred_fallthru
          _
        // Predicated region
        $region21: #{tpu_custom_call.1} parent=11 // pred_check
          %p329 = pneg %p114
        $region22: #{tpu_custom_call.1} parent=11 // pred_check_branch
          %331 = sbr.rel (%p329) target = $region24
        $region23: #{tpu_custom_call.1} parent=11 // pred_region
          %333 = vsyncadd [#allocation3], 0
          %s335 = sshll.u32 %s3, 4
          %s336 = int_to_ptr.hbm [resolvable:$true] %s335
          %s337 = sshll.u32 [#allocation2], 4
          %s338 = int_to_ptr.vmem [resolvable:$true] %s337
          %340 = dma.hbm_to_vmem [thread:$0]  %s336, 16, %s338, [#allocation3]
        $region24: #{tpu_custom_call.1} parent=11 // pred_fallthru
          _
        // Predicated region
        $region25: #{tpu_custom_call.1} parent=11 // pred_check
          %p341 = pneg %p135
        $region26: #{tpu_custom_call.1} parent=11 // pred_check_branch
          %343 = sbr.rel (%p341) target = $region28
        $region27: #{tpu_custom_call.1} parent=11 // pred_region
          _
        $region28: #{tpu_custom_call.1} parent=11 // pred_fallthru
          _
        // Predicated region
        $region29: #{tpu_custom_call.1} parent=11 // pred_check
          %p344 = pneg %p156
        $region30: #{tpu_custom_call.1} parent=11 // pred_check_branch
          %346 = sbr.rel (%p344) target = $region32
        $region31: #{tpu_custom_call.1} parent=11 // pred_region
          %348 = vsyncadd [#allocation6], 0
          %s350 = sshll.u32 %s5, 4
          %s351 = int_to_ptr.hbm [resolvable:$true] %s350
          %s352 = sshll.u32 [#allocation5], 4
          %s353 = int_to_ptr.vmem [resolvable:$true] %s352
          %355 = dma.hbm_to_vmem [thread:$0]  %s351, 16, %s353, [#allocation6]
        $region32: #{tpu_custom_call.1} parent=11 // pred_fallthru
          _
        // Predicated region
        $region33: #{tpu_custom_call.1} parent=11 // pred_check
          %p356 = pneg %p177
        $region34: #{tpu_custom_call.1} parent=11 // pred_check_branch
          %358 = sbr.rel (%p356) target = $region36
        $region35: #{tpu_custom_call.1} parent=11 // pred_region
          %360 = vsyncadd [#allocation6], 0
          %s361 = sshll.u32 %s6, 4
          %s362 = int_to_ptr.hbm [resolvable:$true] %s361
          %s363 = sshll.u32 [#allocation7], 4
          %s364 = int_to_ptr.vmem [resolvable:$true] %s363
          %369 = dma.hbm_to_vmem [thread:$0]  %s362, 512, %s364, [#allocation6], 128, 128, 8
        $region36: #{tpu_custom_call.1} parent=11 // pred_fallthru
          _
        // Predicated region
        $region37: #{tpu_custom_call.1} parent=11 // pred_check
          %p370 = pneg %p198
        $region38: #{tpu_custom_call.1} parent=11 // pred_check_branch
          %372 = sbr.rel (%p370) target = $region40
        $region39: #{tpu_custom_call.1} parent=11 // pred_region
          %374 = vsyncadd [#allocation9], 0
          %s376 = sshll.u32 %s7, 4
          %s377 = int_to_ptr.hbm [resolvable:$true] %s376
          %s378 = sshll.u32 [#allocation8], 4
          %s379 = int_to_ptr.vmem [resolvable:$true] %s378
          %381 = dma.hbm_to_vmem [thread:$0]  %s377, 16, %s379, [#allocation9]
        $region40: #{tpu_custom_call.1} parent=11 // pred_fallthru
          _
        // Predicated region
        $region41: #{tpu_custom_call.1} parent=11 // pred_check
          %p382 = pneg %p219
        $region42: #{tpu_custom_call.1} parent=11 // pred_check_branch
          %384 = sbr.rel (%p382) target = $region44
        $region43: #{tpu_custom_call.1} parent=11 // pred_region
          %386 = vsyncadd [#allocation9], 0
          %s388 = sshll.u32 %s8, 4
          %s389 = int_to_ptr.hbm [resolvable:$true] %s388
          %s390 = sshll.u32 [#allocation10], 4
          %s391 = int_to_ptr.vmem [resolvable:$true] %s390
          %393 = dma.hbm_to_vmem [thread:$0]  %s389, 16, %s391, [#allocation9]
        $region44: #{tpu_custom_call.1} parent=11 // pred_fallthru
          _
        // Predicated region
        $region45: #{tpu_custom_call.1} parent=11 // pred_check
          %p394 = pneg %p240
        $region46: #{tpu_custom_call.1} parent=11 // pred_check_branch
          %396 = sbr.rel (%p394) target = $region48
        $region47: #{tpu_custom_call.1} parent=11 // pred_region
          %398 = vsyncadd [#allocation12], 0
          %s400 = sshll.u32 %s9, 4
          %s401 = int_to_ptr.hbm [resolvable:$true] %s400
          %s402 = sshll.u32 [#allocation11], 4
          %s403 = int_to_ptr.vmem [resolvable:$true] %s402
          %405 = dma.hbm_to_vmem [thread:$0]  %s401, 16, %s403, [#allocation12]
        $region48: #{tpu_custom_call.1} parent=11 // pred_fallthru
          _
        // Predicated region
        $region49: #{tpu_custom_call.1} parent=11 // pred_check
          %p406 = pneg %p261
        $region50: #{tpu_custom_call.1} parent=11 // pred_check_branch
          %408 = sbr.rel (%p406) target = $region52
        $region51: #{tpu_custom_call.1} parent=11 // pred_region
          _
        $region52: #{tpu_custom_call.1} parent=11 // pred_fallthru
          _
        // Predicated region
        $region53: #{tpu_custom_call.1} parent=11 // pred_check
          %p409 = pneg %p282
        $region54: #{tpu_custom_call.1} parent=11 // pred_check_branch
          %411 = sbr.rel (%p409) target = $region56
        $region55: #{tpu_custom_call.1} parent=11 // pred_region
          _
        $region56: #{tpu_custom_call.1} parent=11 // pred_fallthru
          _
      $region12: #{tpu_custom_call.1} parent=5 // pred_fallthru
        _
      %p412 = scmp.lt.s32.totalorder %s25, 2
      // Predicated region
      $region57: #{tpu_custom_call.1} parent=5 // pred_check
        %p413 = pneg %p412
      $region58: #{tpu_custom_call.1} parent=5 // pred_check_branch
        %415 = sbr.rel (%p413) target = $region60
      $region59: #{tpu_custom_call.1} parent=5 // pred_region
        // Predicated region
        $region61: #{tpu_custom_call.1} parent=59 // pred_check
          %p416 = pneg %p45
        $region62: #{tpu_custom_call.1} parent=59 // pred_check_branch
          %418 = sbr.rel (%p416) target = $region64
        $region63: #{tpu_custom_call.1} parent=59 // pred_region
          %s419 = smul.u32 8, %s25
          %p420 = scmp.lt.s32.totalorder %s419, 15
          %s421 = scalar_select %p420, %s419, 15
          %s422 = smul.addr %s421, 8
          %s423 = scalar_lea.vmem %s0, %s422
          %s424 = smul.u32 8, %s25
        $region64: #{tpu_custom_call.1} parent=59 // pred_fallthru
          _
      $region60: #{tpu_custom_call.1} parent=5 // pred_fallthru
        _
      %p425 = scmp.le.s32.totalorder 1, %s25
      %p426 = scmp.lt.s32.totalorder %s25, 3
      %p427 = pnand %p425, %p426
      %p428 = pneg %p427
      // Predicated region
      $region65: #{tpu_custom_call.1} parent=5 // pred_check
        _
      $region66: #{tpu_custom_call.1} parent=5 // pred_check_branch
        %430 = sbr.rel (%p427) target = $region68
      $region67: #{tpu_custom_call.1} parent=5 // pred_region
        %s431 = ssub.s32 %s25, 1
        // Predicated region
        $region69: #{tpu_custom_call.1} parent=67 // pred_check
          %p432 = pneg %p114
        $region70: #{tpu_custom_call.1} parent=67 // pred_check_branch
          %434 = sbr.rel (%p432) target = $region72
        $region71: #{tpu_custom_call.1} parent=67 // pred_region
          %436 = dma.done [#allocation3], 16
        $region72: #{tpu_custom_call.1} parent=67 // pred_fallthru
          _
        // Predicated region
        $region73: #{tpu_custom_call.1} parent=67 // pred_check
          %p437 = pneg %p156
        $region74: #{tpu_custom_call.1} parent=67 // pred_check_branch
          %439 = sbr.rel (%p437) target = $region76
        $region75: #{tpu_custom_call.1} parent=67 // pred_region
          %441 = dma.done [#allocation6], 16
        $region76: #{tpu_custom_call.1} parent=67 // pred_fallthru
          _
        // Predicated region
        $region77: #{tpu_custom_call.1} parent=67 // pred_check
          %p442 = pneg %p177
        $region78: #{tpu_custom_call.1} parent=67 // pred_check_branch
          %444 = sbr.rel (%p442) target = $region80
        $region79: #{tpu_custom_call.1} parent=67 // pred_region
          %446 = dma.done [#allocation6], 512
        $region80: #{tpu_custom_call.1} parent=67 // pred_fallthru
          _
        // Predicated region
        $region81: #{tpu_custom_call.1} parent=67 // pred_check
          %p447 = pneg %p198
        $region82: #{tpu_custom_call.1} parent=67 // pred_check_branch
          %449 = sbr.rel (%p447) target = $region84
        $region83: #{tpu_custom_call.1} parent=67 // pred_region
          %451 = dma.done [#allocation9], 16
        $region84: #{tpu_custom_call.1} parent=67 // pred_fallthru
          _
        // Predicated region
        $region85: #{tpu_custom_call.1} parent=67 // pred_check
          %p452 = pneg %p219
        $region86: #{tpu_custom_call.1} parent=67 // pred_check_branch
          %454 = sbr.rel (%p452) target = $region88
        $region87: #{tpu_custom_call.1} parent=67 // pred_region
          %456 = dma.done [#allocation9], 16
        $region88: #{tpu_custom_call.1} parent=67 // pred_fallthru
          _
        // Predicated region
        $region89: #{tpu_custom_call.1} parent=67 // pred_check
          %p457 = pneg %p240
        $region90: #{tpu_custom_call.1} parent=67 // pred_check_branch
          %459 = sbr.rel (%p457) target = $region92
        $region91: #{tpu_custom_call.1} parent=67 // pred_region
          %461 = dma.done [#allocation12], 16
        $region92: #{tpu_custom_call.1} parent=67 // pred_fallthru
          _
        %s462 = smul.u32 8, %s30
        %p463 = scmp.lt.s32.totalorder %s462, 15
        %s464 = scalar_select %p463, %s462, 15
        %s465 = smul.addr %s464, 8
        %s466 = scalar_lea.vmem %s0, %s465
        %p467 = pneg %p51
        %p468 = pneg %p48
        %p469 = pneg %p72
        %p470 = pneg %p69
        %p471 = pneg %p93
        %p472 = pneg %p90
        %p473 = pneg %p114
        %p474 = pneg %p111
        %p475 = pneg %p135
        %p476 = pneg %p132
        %p477 = pneg %p156
        %p478 = pneg %p153
        %p479 = pneg %p177
        %p480 = pneg %p174
        %p481 = pneg %p198
        %p482 = pneg %p195
        %p483 = pneg %p219
        %p484 = pneg %p216
        %p485 = pneg %p240
        %p486 = pneg %p237
        %p487 = pneg %p261
        %p488 = pneg %p258
        %p489 = pneg %p282
        %p490 = pneg %p279
        %p491 = pneg %p308
        %p492 = pneg %p305
        %s493 = sand.u32 %s295, 1
        %s494 = scalar_lea.sflag [#allocation4], %s493
        %s495 = sand.u32 %s295, 1
        %s496 = smul.addr %s495, 8
        %s497 = scalar_lea.vmem [#allocation13], %s496
        %s498 = smul.u32 8, %s30
        %p499 = scmp.lt.s32.totalorder %s498, 15
        %s500 = scalar_select %p499, %s498, 15
        %s501 = smul.addr %s500, 8
        %s502 = scalar_lea.vmem %s0, %s501
        %s503 = smul.u32 8, %s30
        %v504 = vld [vmem:[%s502] sm:$0xff]
        %v505 = vld [vmem:[%s502 + $0x8] sm:$0xff]
        %v506 = vld [vmem:[%s502 + $0x10] sm:$0xff]
        %v507 = vld [vmem:[%s502 + $0x18] sm:$0xff]
        %v508 = vld [vmem:[%s502 + $0x20] sm:$0xff]
        %v509 = vld [vmem:[%s502 + $0x28] sm:$0xff]
        %v510 = vld [vmem:[%s502 + $0x30] sm:$0xff]
        %v511 = vld [vmem:[%s502 + $0x38] sm:$0xff]
        %v512 = vld [vmem:[%s2] sm:$0xff]
        %v513 = vld [vmem:[%s2 + $0x8] sm:$0xff]
        %v514 = vld [vmem:[%s2 + $0x10] sm:$0xff]
        %v515 = vld [vmem:[%s2 + $0x18] sm:$0xff]
        %v516 = vld [vmem:[%s2 + $0x20] sm:$0xff]
        %v517 = vld [vmem:[%s2 + $0x28] sm:$0xff]
        %v518 = vld [vmem:[#allocation2] sm:$0x1]
        %v520 = vperm.slane %v518, 0
        %vm522 = vcmask 392192
        %v524 = vsel %vm522, %v504, 0
        %v527 = vsel %vm522, %v505, 0
        %v530 = vsel %vm522, %v506, 0
        %v533 = vsel %vm522, %v507, 0
        %v536 = vsel %vm522, %v508, 0
        %v539 = vsel %vm522, %v509, 0
        %v542 = vsel %vm522, %v510, 0
        %v545 = vsel %vm522, %v511, 0
        %547 = vmatpush.msra.mxu0 0.0
        %548 = vmatpush.msra.mxu0 0.0
        %549 = vmatpush.msra.mxu0 0.0
        %550 = vmatpush.msra.mxu0 0.0
        %551 = vmatpush.msra.mxu0 0.0
        %552 = vmatpush.msra.mxu0 0.0
        %553 = vmatpush.msra.mxu0 0.0
        %554 = vmatpush.msra.mxu0 0.0
        %555 = vmatpush.msra.mxu0 0.0
        %556 = vmatpush.msra.mxu0 0.0
        %557 = vmatpush.msra.mxu0 %v517
        %558 = vmatpush.msra.mxu0 %v516
        %559 = vmatpush.msra.mxu0 %v515
        %560 = vmatpush.msra.mxu0 %v514
        %561 = vmatpush.msra.mxu0 %v513
        %562 = vmatpush.msra.mxu0 %v512
        %563 = vmatmul.f32.gmra.mxu0 %v524
        %v564 = vpop.f32.mrf.mxu0
        %v565 = vadd.f32 %v520, %v564
        %566 = vmatmul.f32.gmra.mxu0 %v527
        %v567 = vpop.f32.mrf.mxu0
        %v568 = vadd.f32 %v520, %v567
        %569 = vmatmul.f32.gmra.mxu0 %v530
        %v570 = vpop.f32.mrf.mxu0
        %v571 = vadd.f32 %v520, %v570
        %572 = vmatmul.f32.gmra.mxu0 %v533
        %v573 = vpop.f32.mrf.mxu0
        %v574 = vadd.f32 %v520, %v573
        %575 = vmatmul.f32.gmra.mxu0 %v536
        %v576 = vpop.f32.mrf.mxu0
        %v577 = vadd.f32 %v520, %v576
        %578 = vmatmul.f32.gmra.mxu0 %v539
        %v579 = vpop.f32.mrf.mxu0
        %v580 = vadd.f32 %v520, %v579
        %581 = vmatmul.f32.gmra.mxu0 %v542
        %v582 = vpop.f32.mrf.mxu0
        %v583 = vadd.f32 %v520, %v582
        %584 = vmatmul.f32.gmra.mxu0 %v545
        %v585 = vpop.f32.mrf.mxu0
        %v586 = vadd.f32 %v520, %v585
        %587 = vdwg.mxu0
        %v588 = vld [vmem:[%s4] sm:$0xff]
        %v589 = vld [vmem:[%s4 + $0x8] sm:$0xff]
        %v590 = vld [vmem:[%s4 + $0x10] sm:$0xff]
        %v591 = vld [vmem:[%s4 + $0x18] sm:$0xff]
        %v592 = vld [vmem:[%s4 + $0x20] sm:$0xff]
        %v593 = vld [vmem:[%s4 + $0x28] sm:$0xff]
        %v594 = vld [vmem:[#allocation5] sm:$0x1]
        %v596 = vperm.slane %v594, 0
        %598 = vmatpush.msra.mxu0 0.0
        %599 = vmatpush.msra.mxu0 0.0
        %600 = vmatpush.msra.mxu0 0.0
        %601 = vmatpush.msra.mxu0 0.0
        %602 = vmatpush.msra.mxu0 0.0
        %603 = vmatpush.msra.mxu0 0.0
        %604 = vmatpush.msra.mxu0 0.0
        %605 = vmatpush.msra.mxu0 0.0
        %606 = vmatpush.msra.mxu0 0.0
        %607 = vmatpush.msra.mxu0 0.0
        %608 = vmatpush.msra.mxu0 %v593
        %609 = vmatpush.msra.mxu0 %v592
        %610 = vmatpush.msra.mxu0 %v591
        %611 = vmatpush.msra.mxu0 %v590
        %612 = vmatpush.msra.mxu0 %v589
        %613 = vmatpush.msra.mxu0 %v588
        %614 = vmatmul.f32.gmra.mxu0 %v524
        %v615 = vpop.f32.mrf.mxu0
        %v616 = vadd.f32 %v596, %v615
        %617 = vmatmul.f32.gmra.mxu0 %v527
        %v618 = vpop.f32.mrf.mxu0
        %v619 = vadd.f32 %v596, %v618
        %620 = vmatmul.f32.gmra.mxu0 %v530
        %v621 = vpop.f32.mrf.mxu0
        %v622 = vadd.f32 %v596, %v621
        %623 = vmatmul.f32.gmra.mxu0 %v533
        %v624 = vpop.f32.mrf.mxu0
        %v625 = vadd.f32 %v596, %v624
        %626 = vmatmul.f32.gmra.mxu0 %v536
        %v627 = vpop.f32.mrf.mxu0
        %v628 = vadd.f32 %v596, %v627
        %629 = vmatmul.f32.gmra.mxu0 %v539
        %v630 = vpop.f32.mrf.mxu0
        %v631 = vadd.f32 %v596, %v630
        %632 = vmatmul.f32.gmra.mxu0 %v542
        %v633 = vpop.f32.mrf.mxu0
        %v634 = vadd.f32 %v596, %v633
        %635 = vmatmul.f32.gmra.mxu0 %v545
        %v636 = vpop.f32.mrf.mxu0
        %v637 = vadd.f32 %v596, %v636
        %638 = vdwg.mxu0
        %v639 = vld [vmem:[%s1] sm:$0x1]
        %v641 = vperm.slane %v639, 0
        %v643 = vmul.f32 %v641, %v565
        %v644 = vmul.f32 %v641, %v568
        %v645 = vmul.f32 %v641, %v571
        %v646 = vmul.f32 %v641, %v574
        %v647 = vmul.f32 %v641, %v577
        %v648 = vmul.f32 %v641, %v580
        %v649 = vmul.f32 %v641, %v583
        %v650 = vmul.f32 %v641, %v586
        %v651 = vld [vmem:[%s10] sm:$0xff]
        %v652 = vld [vmem:[%s10 + $0x8] sm:$0xff]
        %v653 = vld [vmem:[%s10 + $0x10] sm:$0xff]
        %v654 = vld [vmem:[%s10 + $0x18] sm:$0xff]
        %vm655 = vcmask 261120
        %v657 = vsel %vm655, %v643, 0
        %v660 = vsel %vm655, %v644, 0
        %v663 = vsel %vm655, %v645, 0
        %v666 = vsel %vm655, %v646, 0
        %v669 = vsel %vm655, %v647, 0
        %v672 = vsel %vm655, %v648, 0
        %v675 = vsel %vm655, %v649, 0
        %v678 = vsel %vm655, %v650, 0
        %680 = vmatpush.msra.mxu0 0.0
        %681 = vmatpush.msra.mxu0 0.0
        %682 = vmatpush.msra.mxu0 0.0
        %683 = vmatpush.msra.mxu0 0.0
        %684 = vmatpush.msra.mxu0 0.0
        %685 = vmatpush.msra.mxu0 0.0
        %686 = vmatpush.msra.mxu0 0.0
        %687 = vmatpush.msra.mxu0 0.0
        %688 = vmatpush.msra.mxu0 0.0
        %689 = vmatpush.msra.mxu0 0.0
        %690 = vmatpush.msra.mxu0 0.0
        %691 = vmatpush.msra.mxu0 0.0
        %692 = vmatpush.msra.mxu0 %v654
        %693 = vmatpush.msra.mxu0 %v653
        %694 = vmatpush.msra.mxu0 %v652
        %695 = vmatpush.msra.mxu0 %v651
        %696 = vmatmul.f32.gmra.mxu0 %v657
        %v697 = vpop.f32.mrf.mxu0
        %v698 = vadd.f32 0.0, %v697
        %699 = vmatmul.f32.gmra.mxu0 %v660
        %v700 = vpop.f32.mrf.mxu0
        %v701 = vadd.f32 0.0, %v700
        %702 = vmatmul.f32.gmra.mxu0 %v663
        %v703 = vpop.f32.mrf.mxu0
        %v704 = vadd.f32 0.0, %v703
        %705 = vmatmul.f32.gmra.mxu0 %v666
        %v706 = vpop.f32.mrf.mxu0
        %v707 = vadd.f32 0.0, %v706
        %708 = vmatmul.f32.gmra.mxu0 %v669
        %v709 = vpop.f32.mrf.mxu0
        %v710 = vadd.f32 0.0, %v709
        %711 = vmatmul.f32.gmra.mxu0 %v672
        %v712 = vpop.f32.mrf.mxu0
        %v713 = vadd.f32 0.0, %v712
        %714 = vmatmul.f32.gmra.mxu0 %v675
        %v715 = vpop.f32.mrf.mxu0
        %v716 = vadd.f32 0.0, %v715
        %717 = vmatmul.f32.gmra.mxu0 %v678
        %v718 = vpop.f32.mrf.mxu0
        %v719 = vadd.f32 0.0, %v718
        %720 = vdwg.mxu0
        %vm721 = vcmask 64512
        %v722 = vsel %vm721, %v698, -inf
        %v723 = vrot.slane %v722, 4
        %v724 = vmax.f32 %v722, %v723
        %v725 = vrot.slane %v724, 2
        %v726 = vmax.f32 %v724, %v725
        %v727 = vrot.slane %v726, 1
        %v728 = vmax.f32 %v726, %v727
        %v729 = vsel %vm721, %v701, -inf
        %v730 = vrot.slane %v729, 4
        %v731 = vmax.f32 %v729, %v730
        %v732 = vrot.slane %v731, 2
        %v733 = vmax.f32 %v731, %v732
        %v734 = vrot.slane %v733, 1
        %v735 = vmax.f32 %v733, %v734
        %v736 = vsel %vm721, %v704, -inf
        %v737 = vrot.slane %v736, 4
        %v738 = vmax.f32 %v736, %v737
        %v739 = vrot.slane %v738, 2
        %v740 = vmax.f32 %v738, %v739
        %v741 = vrot.slane %v740, 1
        %v742 = vmax.f32 %v740, %v741
        %v743 = vsel %vm721, %v707, -inf
        %v744 = vrot.slane %v743, 4
        %v745 = vmax.f32 %v743, %v744
        %v746 = vrot.slane %v745, 2
        %v747 = vmax.f32 %v745, %v746
        %v748 = vrot.slane %v747, 1
        %v749 = vmax.f32 %v747, %v748
        %v750 = vsel %vm721, %v710, -inf
        %v751 = vrot.slane %v750, 4
        %v752 = vmax.f32 %v750, %v751
        %v753 = vrot.slane %v752, 2
        %v754 = vmax.f32 %v752, %v753
        %v755 = vrot.slane %v754, 1
        %v756 = vmax.f32 %v754, %v755
        %v757 = vsel %vm721, %v713, -inf
        %v758 = vrot.slane %v757, 4
        %v759 = vmax.f32 %v757, %v758
        %v760 = vrot.slane %v759, 2
        %v761 = vmax.f32 %v759, %v760
        %v762 = vrot.slane %v761, 1
        %v763 = vmax.f32 %v761, %v762
        %v764 = vsel %vm721, %v716, -inf
        %v765 = vrot.slane %v764, 4
        %v766 = vmax.f32 %v764, %v765
        %v767 = vrot.slane %v766, 2
        %v768 = vmax.f32 %v766, %v767
        %v769 = vrot.slane %v768, 1
        %v770 = vmax.f32 %v768, %v769
        %v771 = vsel %vm721, %v719, -inf
        %v772 = vrot.slane %v771, 4
        %v773 = vmax.f32 %v771, %v772
        %v774 = vrot.slane %v773, 2
        %v775 = vmax.f32 %v773, %v774
        %v776 = vrot.slane %v775, 1
        %v777 = vmax.f32 %v775, %v776
        %v778 = vsub.f32 %v698, %v728
        %v779 = vsub.f32 %v701, %v735
        %v780 = vsub.f32 %v704, %v742
        %v781 = vsub.f32 %v707, %v749
        %v782 = vsub.f32 %v710, %v756
        %v783 = vsub.f32 %v713, %v763
        %v784 = vsub.f32 %v716, %v770
        %v785 = vsub.f32 %v719, %v777
        %v786 = vmul.f32 %v778, 1.442695
        %v787 = vpow.pop %v786
        %v788 = vmul.f32 %v779, 1.442695
        %v789 = vpow.pop %v788
        %v790 = vmul.f32 %v780, 1.442695
        %v791 = vpow.pop %v790
        %v792 = vmul.f32 %v781, 1.442695
        %v793 = vpow.pop %v792
        %v794 = vmul.f32 %v782, 1.442695
        %v795 = vpow.pop %v794
        %v796 = vmul.f32 %v783, 1.442695
        %v797 = vpow.pop %v796
        %v798 = vmul.f32 %v784, 1.442695
        %v799 = vpow.pop %v798
        %v800 = vmul.f32 %v785, 1.442695
        %v801 = vpow.pop %v800
        %v802 = vsel %vm721, %v787, 0.0
        %v803 = vrot.slane %v802, 4
        %v804 = vadd.f32 %v802, %v803
        %v805 = vrot.slane %v804, 2
        %v806 = vadd.f32 %v804, %v805
        %v807 = vrot.slane %v806, 1
        %v808 = vadd.f32 %v806, %v807
        %v809 = vsel %vm721, %v789, 0.0
        %v810 = vrot.slane %v809, 4
        %v811 = vadd.f32 %v809, %v810
        %v812 = vrot.slane %v811, 2
        %v813 = vadd.f32 %v811, %v812
        %v814 = vrot.slane %v813, 1
        %v815 = vadd.f32 %v813, %v814
        %v816 = vsel %vm721, %v791, 0.0
        %v817 = vrot.slane %v816, 4
        %v818 = vadd.f32 %v816, %v817
        %v819 = vrot.slane %v818, 2
        %v820 = vadd.f32 %v818, %v819
        %v821 = vrot.slane %v820, 1
        %v822 = vadd.f32 %v820, %v821
        %v823 = vsel %vm721, %v793, 0.0
        %v824 = vrot.slane %v823, 4
        %v825 = vadd.f32 %v823, %v824
        %v826 = vrot.slane %v825, 2
        %v827 = vadd.f32 %v825, %v826
        %v828 = vrot.slane %v827, 1
        %v829 = vadd.f32 %v827, %v828
        %v830 = vsel %vm721, %v795, 0.0
        %v831 = vrot.slane %v830, 4
        %v832 = vadd.f32 %v830, %v831
        %v833 = vrot.slane %v832, 2
        %v834 = vadd.f32 %v832, %v833
        %v835 = vrot.slane %v834, 1
        %v836 = vadd.f32 %v834, %v835
        %v837 = vsel %vm721, %v797, 0.0
        %v838 = vrot.slane %v837, 4
        %v839 = vadd.f32 %v837, %v838
        %v840 = vrot.slane %v839, 2
        %v841 = vadd.f32 %v839, %v840
        %v842 = vrot.slane %v841, 1
        %v843 = vadd.f32 %v841, %v842
        %v844 = vsel %vm721, %v799, 0.0
        %v845 = vrot.slane %v844, 4
        %v846 = vadd.f32 %v844, %v845
        %v847 = vrot.slane %v846, 2
        %v848 = vadd.f32 %v846, %v847
        %v849 = vrot.slane %v848, 1
        %v850 = vadd.f32 %v848, %v849
        %v851 = vsel %vm721, %v801, 0.0
        %v852 = vrot.slane %v851, 4
        %v853 = vadd.f32 %v851, %v852
        %v854 = vrot.slane %v853, 2
        %v855 = vadd.f32 %v853, %v854
        %v856 = vrot.slane %v855, 1
        %v857 = vadd.f32 %v855, %v856
        %v858 = vrcp.pop %v808
        %v859 = vrcp.pop %v815
        %v860 = vrcp.pop %v822
        %v861 = vrcp.pop %v829
        %v862 = vrcp.pop %v836
        %v863 = vrcp.pop %v843
        %v864 = vrcp.pop %v850
        %v865 = vrcp.pop %v857
        %v866 = vmul.f32 %v787, %v858
        %v867 = vmul.f32 %v789, %v859
        %v868 = vmul.f32 %v791, %v860
        %v869 = vmul.f32 %v793, %v861
        %v870 = vmul.f32 %v795, %v862
        %v871 = vmul.f32 %v797, %v863
        %v872 = vmul.f32 %v799, %v864
        %v873 = vmul.f32 %v801, %v865
        %v874 = vld [vmem:[%s11] sm:$0xff]
        %v876 = vsel %vm721, %v866, 0
        %v879 = vsel %vm721, %v867, 0
        %v882 = vsel %vm721, %v868, 0
        %v885 = vsel %vm721, %v869, 0
        %v888 = vsel %vm721, %v870, 0
        %v891 = vsel %vm721, %v871, 0
        %v894 = vsel %vm721, %v872, 0
        %v897 = vsel %vm721, %v873, 0
        %899 = vmatpush.msra.mxu0 0.0
        %900 = vmatpush.msra.mxu0 0.0
        %901 = vmatpush.msra.mxu0 0.0
        %902 = vmatpush.msra.mxu0 0.0
        %903 = vmatpush.msra.mxu0 0.0
        %904 = vmatpush.msra.mxu0 0.0
        %905 = vmatpush.msra.mxu0 0.0
        %906 = vmatpush.msra.mxu0 0.0
        %907 = vmatpush.msra.mxu0 0.0
        %908 = vmatpush.msra.mxu0 0.0
        %909 = vmatpush.msra.mxu0 0.0
        %910 = vmatpush.msra.mxu0 0.0
        %911 = vmatpush.msra.mxu0 0.0
        %912 = vmatpush.msra.mxu0 0.0
        %913 = vmatpush.msra.mxu0 0.0
        %914 = vmatpush.msra.mxu0 %v874
        %915 = vmatmul.f32.gmra.mxu0 %v876
        %v916 = vpop.f32.mrf.mxu0
        %v917 = vadd.f32 0.0, %v916
        %918 = vmatmul.f32.gmra.mxu0 %v879
        %v919 = vpop.f32.mrf.mxu0
        %v920 = vadd.f32 0.0, %v919
        %921 = vmatmul.f32.gmra.mxu0 %v882
        %v922 = vpop.f32.mrf.mxu0
        %v923 = vadd.f32 0.0, %v922
        %924 = vmatmul.f32.gmra.mxu0 %v885
        %v925 = vpop.f32.mrf.mxu0
        %v926 = vadd.f32 0.0, %v925
        %927 = vmatmul.f32.gmra.mxu0 %v888
        %v928 = vpop.f32.mrf.mxu0
        %v929 = vadd.f32 0.0, %v928
        %930 = vmatmul.f32.gmra.mxu0 %v891
        %v931 = vpop.f32.mrf.mxu0
        %v932 = vadd.f32 0.0, %v931
        %933 = vmatmul.f32.gmra.mxu0 %v894
        %v934 = vpop.f32.mrf.mxu0
        %v935 = vadd.f32 0.0, %v934
        %936 = vmatmul.f32.gmra.mxu0 %v897
        %v937 = vpop.f32.mrf.mxu0
        %v938 = vadd.f32 0.0, %v937
        %939 = vdwg.mxu0
        %v940 = vmul.f32 %v917, %v616
        %v941 = vmul.f32 %v920, %v619
        %v942 = vmul.f32 %v923, %v622
        %v943 = vmul.f32 %v926, %v625
        %v944 = vmul.f32 %v929, %v628
        %v945 = vmul.f32 %v932, %v631
        %v946 = vmul.f32 %v935, %v634
        %v947 = vmul.f32 %v938, %v637
        %v948 = vsel %vm655, %v940, 0.0
        %v949 = vrot.slane %v948, 4
        %v950 = vadd.f32 %v948, %v949
        %v951 = vrot.slane %v950, 2
        %v952 = vadd.f32 %v950, %v951
        %v953 = vrot.slane %v952, 1
        %v954 = vadd.f32 %v952, %v953
        %v955 = vsel %vm655, %v941, 0.0
        %v956 = vrot.slane %v955, 4
        %v957 = vadd.f32 %v955, %v956
        %v958 = vrot.slane %v957, 2
        %v959 = vadd.f32 %v957, %v958
        %v960 = vrot.slane %v959, 1
        %v961 = vadd.f32 %v959, %v960
        %v962 = vsel %vm655, %v942, 0.0
        %v963 = vrot.slane %v962, 4
        %v964 = vadd.f32 %v962, %v963
        %v965 = vrot.slane %v964, 2
        %v966 = vadd.f32 %v964, %v965
        %v967 = vrot.slane %v966, 1
        %v968 = vadd.f32 %v966, %v967
        %v969 = vsel %vm655, %v943, 0.0
        %v970 = vrot.slane %v969, 4
        %v971 = vadd.f32 %v969, %v970
        %v972 = vrot.slane %v971, 2
        %v973 = vadd.f32 %v971, %v972
        %v974 = vrot.slane %v973, 1
        %v975 = vadd.f32 %v973, %v974
        %v976 = vsel %vm655, %v944, 0.0
        %v977 = vrot.slane %v976, 4
        %v978 = vadd.f32 %v976, %v977
        %v979 = vrot.slane %v978, 2
        %v980 = vadd.f32 %v978, %v979
        %v981 = vrot.slane %v980, 1
        %v982 = vadd.f32 %v980, %v981
        %v983 = vsel %vm655, %v945, 0.0
        %v984 = vrot.slane %v983, 4
        %v985 = vadd.f32 %v983, %v984
        %v986 = vrot.slane %v985, 2
        %v987 = vadd.f32 %v985, %v986
        %v988 = vrot.slane %v987, 1
        %v989 = vadd.f32 %v987, %v988
        %v990 = vsel %vm655, %v946, 0.0
        %v991 = vrot.slane %v990, 4
        %v992 = vadd.f32 %v990, %v991
        %v993 = vrot.slane %v992, 2
        %v994 = vadd.f32 %v992, %v993
        %v995 = vrot.slane %v994, 1
        %v996 = vadd.f32 %v994, %v995
        %v997 = vsel %vm655, %v947, 0.0
        %v998 = vrot.slane %v997, 4
        %v999 = vadd.f32 %v997, %v998
        %v1000 = vrot.slane %v999, 2
        %v1001 = vadd.f32 %v999, %v1000
        %v1002 = vrot.slane %v1001, 1
        %v1003 = vadd.f32 %v1001, %v1002
        %v1004 = vld [vmem:[#allocation7] sm:$0xff]
        %v1005 = vld [vmem:[#allocation7 + $0x8] sm:$0xff]
        %v1006 = vld [vmem:[#allocation7 + $0x10] sm:$0xff]
        %v1007 = vld [vmem:[#allocation7 + $0x18] sm:$0xff]
        %v1008 = vld [vmem:[#allocation8] sm:$0x1]
        %v1010 = vperm.slane %v1008, 0
        %vm1020 = vcmask 1041409
        %v1021 = vsel %vm1020, %v961, %v954
        %vm1022 = vcmask 1042434
        %v1023 = vsel %vm1022, %v968, %v1021
        %vm1024 = vcmask 1043459
        %v1025 = vsel %vm1024, %v975, %v1023
        %vm1026 = vcmask 1044484
        %v1027 = vsel %vm1026, %v982, %v1025
        %vm1028 = vcmask 1045509
        %v1029 = vsel %vm1028, %v989, %v1027
        %vm1030 = vcmask 1046534
        %v1031 = vsel %vm1030, %v996, %v1029
        %vm1032 = vcmask 1047559
        %v1033 = vsel %vm1032, %v1003, %v1031
        %v1034 = vsel %vm655, %v1033, 0
        %1036 = vmatpush.msra.mxu0 0.0
        %1037 = vmatpush.msra.mxu0 0.0
        %1038 = vmatpush.msra.mxu0 0.0
        %1039 = vmatpush.msra.mxu0 0.0
        %1040 = vmatpush.msra.mxu0 0.0
        %1041 = vmatpush.msra.mxu0 0.0
        %1042 = vmatpush.msra.mxu0 0.0
        %1043 = vmatpush.msra.mxu0 0.0
        %1044 = vmatpush.msra.mxu0 0.0
        %1045 = vmatpush.msra.mxu0 0.0
        %1046 = vmatpush.msra.mxu0 0.0
        %1047 = vmatpush.msra.mxu0 0.0
        %1048 = vmatpush.msra.mxu0 %v1007
        %1049 = vmatpush.msra.mxu0 %v1006
        %1050 = vmatpush.msra.mxu0 %v1005
        %1051 = vmatpush.msra.mxu0 %v1004
        %1052 = vmatmul.f32.gmra.mxu0 %v1034
        %v1053 = vpop.f32.mrf.mxu0
        %v1054 = vadd.f32 %v1010, %v1053
        %1055 = vdwg.mxu0
        %v1056 = vsel %vm655, %v1054, 0.0
        %1057 = vadd.xlane.f32.xlu0 %v1056
        %v1058 = vpop.xlane.xlu0 %1057
        %v1059 = vrcp.pop 32.0
        %v1060 = vmul.f32 32.0, %v1059
        %v1061 = vsub.f32 1.0, %v1060
        %v1062 = vmul.f32 %v1059, %v1061
        %v1063 = vadd.f32 %v1059, %v1062
        %vm1064 = vweird.f32 %v1059
        %v1065 = vsel %vm1064, %v1059, %v1063
        %v1066 = vmul.f32 %v1058, %v1065
        %v1067 = vsub.f32 %v1054, %v1066
        %v1068 = vmul.f32 %v1067, %v1067
        %v1069 = vsel %vm655, %v1068, 0.0
        %1070 = vadd.xlane.f32.xlu0 %v1069
        %v1071 = vpop.xlane.xlu0 %1070
        %v1072 = vmul.f32 %v1071, %v1065
        %v1073 = vadd.f32 %v1072, 1e-05
        %v1074 = vrsqrt.pop %v1073
        %v1075 = vmul.f32 %v1074, %v1073
        %v1076 = vmul.f32 %v1075, %v1074
        %v1077 = vmul.f32 0.5, %v1076
        %v1078 = vsub.f32 1.5, %v1077
        %v1079 = vmul.f32 %v1074, %v1078
        %vm1080 = vweird.f32 %v1073
        %vm1081 = vweird.f32 %v1074
        %vm1082 = vmor %vm1080, %vm1081
        %v1083 = vsel %vm1082, %v1074, %v1079
        %v1084 = vmul.f32 %v1067, %v1083
        %v1085 = vld [vmem:[#allocation10] sm:$0x1]
        %v1087 = vperm.slane %v1085, 0
        %v1089 = vmul.f32 %v1084, %v1087
        %v1090 = vld [vmem:[#allocation11] sm:$0x1]
        %v1092 = vperm.slane %v1090, 0
        %v1094 = vadd.f32 %v1089, %v1092
        %1095 = vst.msk [vmem:[%s497] sm:$0xff] %vm655, %v1094
        %s1096 = sand.u32 %s295, 1
        %s1097 = scalar_lea.sflag [#allocation4], %s1096
        %s1098 = sand.u32 %s295, 1
        %s1099 = smul.addr %s1098, 8
        %s1100 = scalar_lea.vmem [#allocation13], %s1099
        // Predicated region
        $region93: #{tpu_custom_call.1} parent=67 // pred_check
          %p1101 = pneg %p305
        $region94: #{tpu_custom_call.1} parent=67 // pred_check_branch
          %1103 = sbr.rel (%p1101) target = $region96
        $region95: #{tpu_custom_call.1} parent=67 // pred_region
          %1105 = vsyncadd %s1097, 0
          %s1106 = smul.addr %s30, 8
          %s1107 = scalar_lea.hbm %s12, %s1106
          %s1109 = sshll.u32 %s1100, 4
          %s1110 = int_to_ptr.vmem [resolvable:$true] %s1109
          %s1111 = sshll.u32 %s1107, 4
          %s1112 = int_to_ptr.hbm [resolvable:$true] %s1111
          %1114 = dma.vmem_to_hbm [thread:$0]  %s1110, 128, %s1112, %s1097
        $region96: #{tpu_custom_call.1} parent=67 // pred_fallthru
          _
      $region68: #{tpu_custom_call.1} parent=5 // pred_fallthru
        _
      %p1115 = scmp.le.s32.totalorder 2, %s25
      // Predicated region
      $region97: #{tpu_custom_call.1} parent=5 // pred_check
        %p1116 = pneg %p1115
      $region98: #{tpu_custom_call.1} parent=5 // pred_check_branch
        %1118 = sbr.rel (%p1116) target = $region100
      $region99: #{tpu_custom_call.1} parent=5 // pred_region
        %s1119 = ssub.s32 %s25, 2
        // Predicated region
        $region101: #{tpu_custom_call.1} parent=99 // pred_check
          %p1120 = pneg %p311
        $region102: #{tpu_custom_call.1} parent=99 // pred_check_branch
          %1122 = sbr.rel (%p1120) target = $region104
        $region103: #{tpu_custom_call.1} parent=99 // pred_region
          %s1123 = sand.u32 %s296, 1
          %s1124 = scalar_lea.sflag [#allocation4], %s1123
          %s1125 = sand.u32 %s296, 1
          %s1126 = smul.addr %s1125, 8
          %s1127 = scalar_lea.vmem [#allocation13], %s1126
          %1129 = dma.done %s1124, 128
        $region104: #{tpu_custom_call.1} parent=99 // pred_fallthru
          _
      $region100: #{tpu_custom_call.1} parent=5 // pred_fallthru
        _
    $region6: #{tpu_custom_call.1} parent=1 // loop_footer
      %s29 = sadd.s32 1, %s25
    $region7: #{tpu_custom_call.1} parent=1 // loop_footer_branch
      %24 = sbr.rel target = $region3
    $region8: #{tpu_custom_call.1} parent=1 // loop_exit
      _
    %1130 = vsyncpa [#allocation3], 1
    %s1131 = scalar_lea.sflag [#allocation3], 1
    %1132 = vsyncpa %s1131, 1
    %1133 = vsyncpa [#allocation6], 1
    %1134 = vsyncpa [#allocation9], 1
    %1135 = vsyncpa [#allocation12], 1
    %1136 = vsyncpa [#allocation4], 1
    %s1137 = scalar_lea.sflag [#allocation4], 1
    %1138 = vsyncpa %s1137, 1

</llo_original>
